<compile_context>
chip_gen: v7x
topology: tpu7x:2x2x1
jax: 0.10.0
libtpu: 0.0.40
codegen_flags: <defaults>
</compile_context>

<pallas_src>
import functools

import jax
import jax.numpy as jnp
from jax.experimental import pallas as pl
from jax.experimental.pallas import tpu as pltpu

BN_EPS = 1e-5
LANE = 128
SUBLANE = 8


def _round_up(v, m):
    return ((v + m - 1) // m) * m


def _mlp_kernel(x_ref, w1_ref, gamma_ref, beta_ref, w2_ref, b2_ref, o_ref,
                sum_ref, sumsq_ref, scale_ref, shift_ref, *, batch_size):
    phase = pl.program_id(0)   # 0: accumulate BN stats, 1: normalize + project
    tile = pl.program_id(1)    # batch-tile index

    @pl.when((phase == 0) & (tile == 0))
    def _init_stats():
        sum_ref[...] = jnp.zeros_like(sum_ref)
        sumsq_ref[...] = jnp.zeros_like(sumsq_ref)

    @pl.when(phase == 0)
    def _accumulate():
        h = jnp.dot(x_ref[...], w1_ref[...], preferred_element_type=jnp.float32)
        sum_ref[...] += jnp.sum(h, axis=0, keepdims=True)
        sumsq_ref[...] += jnp.sum(h * h, axis=0, keepdims=True)

    @pl.when(phase == 1)
    def _normalize_project():
        # Fold BatchNorm affine into a single scale/shift once per kernel run
        # (not per tile) and keep it in VMEM scratch; rsqrt runs on the EUP slot.
        @pl.when(tile == 0)
        def _fold_bn():
            inv_n = jnp.float32(1.0 / batch_size)
            mean = sum_ref[...] * inv_n
            var = jnp.maximum(sumsq_ref[...] * inv_n - mean * mean, 0.0)
            scale = gamma_ref[...] * jax.lax.rsqrt(var + BN_EPS)
            scale_ref[...] = scale
            shift_ref[...] = beta_ref[...] - mean * scale

        h = jnp.dot(x_ref[...], w1_ref[...], preferred_element_type=jnp.float32)
        h = jnp.maximum(h * scale_ref[...] + shift_ref[...], 0.0)  # BN + ReLU fused
        out = jnp.dot(h, w2_ref[...], preferred_element_type=jnp.float32) + b2_ref[...]
        o_ref[...] = out.astype(o_ref.dtype)


def mlp_forward(x, w1, b1, gamma, beta, w2, b2, *, batch_tile=256):
    """x: [B, in_dim]; w1: [in_dim, hidden]; w2: [hidden, out] (pre-transposed vs nn.Linear)."""
    del b1  # cancelled exactly by training-mode BatchNorm mean subtraction

    B, in_dim = x.shape
    hidden = w1.shape[1]
    out_dim = w2.shape[1]

    # ---- pad feature dims to lane multiples (dense, unmasked vst) ----
    hidden_p = _round_up(hidden, LANE)
    out_p = _round_up(out_dim, LANE)
    if hidden_p != hidden:
        w1 = jnp.pad(w1, ((0, 0), (0, hidden_p - hidden)))
        gamma = jnp.pad(gamma, (0, hidden_p - hidden))
        beta = jnp.pad(beta, (0, hidden_p - hidden))
        w2 = jnp.pad(w2, ((0, hidden_p - hidden), (0, 0)))
    if out_p != out_dim:
        w2 = jnp.pad(w2, ((0, 0), (0, out_p - out_dim)))
        b2 = jnp.pad(b2, (0, out_p - out_dim))

    # ---- batch tiling (tile sized for the v7x 64 MiB VMEM budget by default) ----
    tm = _round_up(min(int(batch_tile), B), SUBLANE)
    B_p = _round_up(B, tm)
    if B_p != B:
        # Zero rows contribute exactly 0 to the BN sums (no pre-BN bias) and the
        # stats divide by the true batch size, so padding is statistics-neutral.
        x = jnp.pad(x, ((0, B_p - B), (0, 0)))
    n_tiles = B_p // tm

    # ---- VMEM budget estimate (inputs double-buffered by the pipeline) ----
    x_bytes = x.dtype.itemsize
    w_bytes = w1.dtype.itemsize
    est = (2 * tm * in_dim * x_bytes
           + 2 * tm * out_p * 4
           + 2 * in_dim * hidden_p * w_bytes
           + 2 * hidden_p * out_p * w_bytes
           + 6 * SUBLANE * max(hidden_p, out_p) * 4
           + 2 * tm * hidden_p * 4)
    vmem_limit = int(min(max(2 * est, 16 << 20), 96 << 20))

    in_specs = [
        pl.BlockSpec((tm, in_dim), lambda p, i: (i, 0)),         # x: batch-tiled
        pl.BlockSpec((in_dim, hidden_p), lambda p, i: (0, 0)),   # w1: resident
        pl.BlockSpec((1, hidden_p), lambda p, i: (0, 0)),        # gamma
        pl.BlockSpec((1, hidden_p), lambda p, i: (0, 0)),        # beta
        pl.BlockSpec((hidden_p, out_p), lambda p, i: (0, 0)),    # w2: resident
        pl.BlockSpec((1, out_p), lambda p, i: (0, 0)),           # b2
    ]
    # Phase 0 parks the (unwritten) output window on block 0, so no HBM writeback
    # of garbage happens per tile; phase 1 walks the real batch tiles.
    out_spec = pl.BlockSpec((tm, out_p), lambda p, i: (i * p, 0))

    out_padded = pl.pallas_call(
        functools.partial(_mlp_kernel, batch_size=B),
        out_shape=jax.ShapeDtypeStruct((B_p, out_p), jnp.float32),
        grid_spec=pltpu.PrefetchScalarGridSpec(
            num_scalar_prefetch=0,
            grid=(2, n_tiles),
            in_specs=in_specs,
            out_specs=out_spec,
            scratch_shapes=[
                pltpu.VMEM((1, hidden_p), jnp.float32),  # per-feature sum
                pltpu.VMEM((1, hidden_p), jnp.float32),  # per-feature sum of squares
                pltpu.VMEM((1, hidden_p), jnp.float32),  # fused BN scale
                pltpu.VMEM((1, hidden_p), jnp.float32),  # fused BN shift
            ],
        ),
        compiler_params=pltpu.CompilerParams(
            # BN stats are a cross-tile reduction carried in VMEM scratch, so the
            # whole grid runs sequentially on one TensorCore.
            # TODO(synk): v7x 2-TC split needs per-core partial stats + cross-core combine.
            dimension_semantics=("arbitrary", "arbitrary"),
            vmem_limit_bytes=vmem_limit,
        ),
    )(x, w1, gamma.reshape(1, -1), beta.reshape(1, -1), w2, b2.reshape(1, -1))

    return out_padded[:B, :out_dim]


def mlp_reference(x, w1, b1, gamma, beta, w2, b2):
    h = x @ w1 + b1
    mean = h.mean(axis=0, keepdims=True)
    var = ((h - mean) ** 2).mean(axis=0, keepdims=True)  # biased var (PyTorch BN norm)
    h = (h - mean) / jnp.sqrt(var + BN_EPS)
    h = h * gamma + beta
    h = jnp.maximum(h, 0.0)
    return h @ w2 + b2


if __name__ == "__main__":
    # Small shapes consistent with MLP(in_dim, hidden_dim, out_dim); hidden/out are
    # deliberately NOT lane multiples and B spans multiple tiles so the padding and
    # the two-pass cross-tile BN reduction are both exercised.
    B, IN_DIM, HIDDEN, OUT_DIM = 24, 32, 192, 80

    key = jax.random.PRNGKey(0)
    kx, kw1, kb1, kg, kbt, kw2, kb2 = jax.random.split(key, 7)

    x = jax.random.normal(kx, (B, IN_DIM), dtype=jnp.float32)

    lim1 = 1.0 / (IN_DIM ** 0.5)
    w1 = jax.random.uniform(kw1, (IN_DIM, HIDDEN), minval=-lim1, maxval=lim1, dtype=jnp.float32)
    b1 = jax.random.uniform(kb1, (HIDDEN,), minval=-lim1, maxval=lim1, dtype=jnp.float32)
    gamma = jax.random.uniform(kg, (HIDDEN,), minval=0.5, maxval=1.5, dtype=jnp.float32)
    beta = jax.random.uniform(kbt, (HIDDEN,), minval=-0.1, maxval=0.1, dtype=jnp.float32)
    lim2 = 1.0 / (HIDDEN ** 0.5)
    w2 = jax.random.uniform(kw2, (HIDDEN, OUT_DIM), minval=-lim2, maxval=lim2, dtype=jnp.float32)
    b2 = jax.random.uniform(kb2, (OUT_DIM,), minval=-lim2, maxval=lim2, dtype=jnp.float32)

    out = mlp_forward(x, w1, b1, gamma, beta, w2, b2, batch_tile=8)
    out = jax.block_until_ready(out)

    ref = mlp_reference(x, w1, b1, gamma, beta, w2, b2)
    assert out.shape == (B, OUT_DIM)
    err = jnp.max(jnp.abs(out - ref))
    assert jnp.allclose(out, ref, atol=2e-4, rtol=2e-4), f"mismatch vs reference (max abs err {err})"

    print("KERNEL_OK")
</pallas_src>

<mosaic_0001>
module attributes {stable_mosaic.version = 11 : i64} {
  func.func @_mlp_kernel(%arg0: i32, %arg1: i32, %arg2: memref<8x32xf32, #tpu.memory_space<vmem>>, %arg3: memref<32x256xf32, #tpu.memory_space<vmem>>, %arg4: memref<1x256xf32, #tpu.memory_space<vmem>>, %arg5: memref<1x256xf32, #tpu.memory_space<vmem>>, %arg6: memref<256x128xf32, #tpu.memory_space<vmem>>, %arg7: memref<1x128xf32, #tpu.memory_space<vmem>>, %arg8: memref<8x128xf32, #tpu.memory_space<vmem>>, %arg9: memref<1x256xf32, #tpu.memory_space<vmem>>, %arg10: memref<1x256xf32, #tpu.memory_space<vmem>>, %arg11: memref<1x256xf32, #tpu.memory_space<vmem>>, %arg12: memref<1x256xf32, #tpu.memory_space<vmem>>) attributes {dimension_semantics = [#tpu.dimension_semantics<arbitrary>, #tpu.dimension_semantics<arbitrary>], iteration_bounds = array<i64: 2, 3>, scalar_prefetch = 0 : i64, scratch_operands = 4 : i64, tpu.core_type = #tpu.core_type<tc>, window_params = [{transform_indices = @transform_0, window_bounds = array<i64: 8, 32>}, {pipeline_mode = #tpu.pipeline_mode<synchronous>, transform_indices = @transform_1, window_bounds = array<i64: 32, 256>}, {pipeline_mode = #tpu.pipeline_mode<synchronous>, transform_indices = @transform_2, window_bounds = array<i64: 1, 256>}, {pipeline_mode = #tpu.pipeline_mode<synchronous>, transform_indices = @transform_3, window_bounds = array<i64: 1, 256>}, {pipeline_mode = #tpu.pipeline_mode<synchronous>, transform_indices = @transform_4, window_bounds = array<i64: 256, 128>}, {pipeline_mode = #tpu.pipeline_mode<synchronous>, transform_indices = @transform_5, window_bounds = array<i64: 1, 128>}, {transform_indices = @transform_6, window_bounds = array<i64: 8, 128>}]} {
    %c0_i32 = arith.constant 0 : i32
    %0 = arith.cmpi eq, %arg0, %c0_i32 : i32
    %c0_i32_0 = arith.constant 0 : i32
    %1 = arith.cmpi eq, %arg1, %c0_i32_0 : i32
    %2 = arith.andi %0, %1 : i1
    %3 = arith.extui %2 : i1 to i32
    %c0_i32_1 = arith.constant 0 : i32
    %4 = arith.cmpi ne, %3, %c0_i32_1 : i32
    scf.if %4 {
      %cst = arith.constant 0.000000e+00 : f32
      %11 = vector.broadcast %cst : f32 to vector<1x256xf32>
      %c0 = arith.constant 0 : index
      %c0_5 = arith.constant 0 : index
      %12 = vector.load %arg9[%c0, %c0_5] : memref<1x256xf32, #tpu.memory_space<vmem>>, vector<1x256xf32>
      tpu.vector_store %arg9[%c0, %c0_5], %11 {strides = array<i32>} : memref<1x256xf32, #tpu.memory_space<vmem>>, vector<1x256xf32>,
      %cst_6 = arith.constant 0.000000e+00 : f32
      %13 = vector.broadcast %cst_6 : f32 to vector<1x256xf32>
      %c0_7 = arith.constant 0 : index
      %c0_8 = arith.constant 0 : index
      %14 = vector.load %arg10[%c0_7, %c0_8] : memref<1x256xf32, #tpu.memory_space<vmem>>, vector<1x256xf32>
      tpu.vector_store %arg10[%c0_7, %c0_8], %13 {strides = array<i32>} : memref<1x256xf32, #tpu.memory_space<vmem>>, vector<1x256xf32>,
    } else {
    }
    %c0_i32_2 = arith.constant 0 : i32
    %5 = arith.cmpi eq, %arg0, %c0_i32_2 : i32
    %6 = arith.extui %5 : i1 to i32
    %c0_i32_3 = arith.constant 0 : i32
    %7 = arith.cmpi ne, %6, %c0_i32_3 : i32
    scf.if %7 {
      %c0 = arith.constant 0 : index
      %c0_5 = arith.constant 0 : index
      %11 = vector.load %arg2[%c0, %c0_5] : memref<8x32xf32, #tpu.memory_space<vmem>>, vector<8x32xf32>
      %c0_6 = arith.constant 0 : index
      %c0_7 = arith.constant 0 : index
      %12 = vector.load %arg3[%c0_6, %c0_7] : memref<32x256xf32, #tpu.memory_space<vmem>>, vector<32x256xf32>
      %cst = arith.constant dense<0.000000e+00> : vector<8x256xf32>
      %13 = tpu.matmul %11, %12, %cst {dimension_numbers = #tpu.dot_dimension_numbers<[1], [0], [0], [1], [0, 0, 1, 1], [], []>} : vector<8x32xf32>, vector<32x256xf32>, vector<8x256xf32> -> vector<8x256xf32>
      %c0_8 = arith.constant 0 : index
      %c0_9 = arith.constant 0 : index
      %14 = vector.load %arg9[%c0_8, %c0_9] : memref<1x256xf32, #tpu.memory_space<vmem>>, vector<1x256xf32>
      %cst_10 = arith.constant dense<0.000000e+00> : vector<256xf32>
      %15 = vector.multi_reduction <add>, %13, %cst_10 [0] : vector<8x256xf32> to vector<256xf32>
      %16 = vector.shape_cast %15 : vector<256xf32> to vector<1x256xf32>
      %17 = arith.addf %14, %16 : vector<1x256xf32>
      %c0_11 = arith.constant 0 : index
      %c0_12 = arith.constant 0 : index
      %18 = vector.load %arg9[%c0_11, %c0_12] : memref<1x256xf32, #tpu.memory_space<vmem>>, vector<1x256xf32>
      tpu.vector_store %arg9[%c0_11, %c0_12], %17 {strides = array<i32>} : memref<1x256xf32, #tpu.memory_space<vmem>>, vector<1x256xf32>,
      %c0_13 = arith.constant 0 : index
      %c0_14 = arith.constant 0 : index
      %19 = vector.load %arg10[%c0_13, %c0_14] : memref<1x256xf32, #tpu.memory_space<vmem>>, vector<1x256xf32>
      %20 = arith.mulf %13, %13 : vector<8x256xf32>
      %cst_15 = arith.constant dense<0.000000e+00> : vector<256xf32>
      %21 = vector.multi_reduction <add>, %20, %cst_15 [0] : vector<8x256xf32> to vector<256xf32>
      %22 = vector.shape_cast %21 : vector<256xf32> to vector<1x256xf32>
      %23 = arith.addf %19, %22 : vector<1x256xf32>
      %c0_16 = arith.constant 0 : index
      %c0_17 = arith.constant 0 : index
      %24 = vector.load %arg10[%c0_16, %c0_17] : memref<1x256xf32, #tpu.memory_space<vmem>>, vector<1x256xf32>
      tpu.vector_store %arg10[%c0_16, %c0_17], %23 {strides = array<i32>} : memref<1x256xf32, #tpu.memory_space<vmem>>, vector<1x256xf32>,
    } else {
    }
    %c1_i32 = arith.constant 1 : i32
    %8 = arith.cmpi eq, %arg0, %c1_i32 : i32
    %9 = arith.extui %8 : i1 to i32
    %c0_i32_4 = arith.constant 0 : i32
    %10 = arith.cmpi ne, %9, %c0_i32_4 : i32
    scf.if %10 {
      %c0_i32_5 = arith.constant 0 : i32
      %11 = arith.cmpi eq, %arg1, %c0_i32_5 : i32
      %12 = arith.extui %11 : i1 to i32
      %c0_i32_6 = arith.constant 0 : i32
      %13 = arith.cmpi ne, %12, %c0_i32_6 : i32
      scf.if %13 {
        %c0_22 = arith.constant 0 : index
        %c0_23 = arith.constant 0 : index
        %31 = vector.load %arg9[%c0_22, %c0_23] : memref<1x256xf32, #tpu.memory_space<vmem>>, vector<1x256xf32>
        %cst_24 = arith.constant 0.0416666679 : f32
        %32 = vector.broadcast %cst_24 : f32 to vector<1x256xf32>
        %33 = arith.mulf %31, %32 : vector<1x256xf32>
        %c0_25 = arith.constant 0 : index
        %c0_26 = arith.constant 0 : index
        %34 = vector.load %arg10[%c0_25, %c0_26] : memref<1x256xf32, #tpu.memory_space<vmem>>, vector<1x256xf32>
        %cst_27 = arith.constant 0.0416666679 : f32
        %35 = vector.broadcast %cst_27 : f32 to vector<1x256xf32>
        %36 = arith.mulf %34, %35 : vector<1x256xf32>
        %37 = arith.mulf %33, %33 : vector<1x256xf32>
        %38 = arith.subf %36, %37 : vector<1x256xf32>
        %cst_28 = arith.constant 0.000000e+00 : f32
        %39 = vector.broadcast %cst_28 : f32 to vector<1x256xf32>
        %40 = arith.maximumf %38, %39 : vector<1x256xf32>
        %c0_29 = arith.constant 0 : index
        %c0_30 = arith.constant 0 : index
        %41 = vector.load %arg4[%c0_29, %c0_30] : memref<1x256xf32, #tpu.memory_space<vmem>>, vector<1x256xf32>
        %cst_31 = arith.constant 9.99999974E-6 : f32
        %42 = vector.broadcast %cst_31 : f32 to vector<1x256xf32>
        %43 = arith.addf %40, %42 : vector<1x256xf32>
        %44 = math.rsqrt %43 : vector<1x256xf32>
        %45 = arith.mulf %41, %44 : vector<1x256xf32>
        %c0_32 = arith.constant 0 : index
        %c0_33 = arith.constant 0 : index
        %46 = vector.load %arg11[%c0_32, %c0_33] : memref<1x256xf32, #tpu.memory_space<vmem>>, vector<1x256xf32>
        tpu.vector_store %arg11[%c0_32, %c0_33], %45 {strides = array<i32>} : memref<1x256xf32, #tpu.memory_space<vmem>>, vector<1x256xf32>,
        %c0_34 = arith.constant 0 : index
        %c0_35 = arith.constant 0 : index
        %47 = vector.load %arg5[%c0_34, %c0_35] : memref<1x256xf32, #tpu.memory_space<vmem>>, vector<1x256xf32>
        %48 = arith.mulf %33, %45 : vector<1x256xf32>
        %49 = arith.subf %47, %48 : vector<1x256xf32>
        %c0_36 = arith.constant 0 : index
        %c0_37 = arith.constant 0 : index
        %50 = vector.load %arg12[%c0_36, %c0_37] : memref<1x256xf32, #tpu.memory_space<vmem>>, vector<1x256xf32>
        tpu.vector_store %arg12[%c0_36, %c0_37], %49 {strides = array<i32>} : memref<1x256xf32, #tpu.memory_space<vmem>>, vector<1x256xf32>,
      } else {
      }
      %c0 = arith.constant 0 : index
      %c0_7 = arith.constant 0 : index
      %14 = vector.load %arg2[%c0, %c0_7] : memref<8x32xf32, #tpu.memory_space<vmem>>, vector<8x32xf32>
      %c0_8 = arith.constant 0 : index
      %c0_9 = arith.constant 0 : index
      %15 = vector.load %arg3[%c0_8, %c0_9] : memref<32x256xf32, #tpu.memory_space<vmem>>, vector<32x256xf32>
      %cst = arith.constant dense<0.000000e+00> : vector<8x256xf32>
      %16 = tpu.matmul %14, %15, %cst {dimension_numbers = #tpu.dot_dimension_numbers<[1], [0], [0], [1], [0, 0, 1, 1], [], []>} : vector<8x32xf32>, vector<32x256xf32>, vector<8x256xf32> -> vector<8x256xf32>
      %c0_10 = arith.constant 0 : index
      %c0_11 = arith.constant 0 : index
      %17 = vector.load %arg11[%c0_10, %c0_11] : memref<1x256xf32, #tpu.memory_space<vmem>>, vector<1x256xf32>
      %18 = vector.broadcast %17 : vector<1x256xf32> to vector<8x256xf32>
      %19 = arith.mulf %16, %18 : vector<8x256xf32>
      %c0_12 = arith.constant 0 : index
      %c0_13 = arith.constant 0 : index
      %20 = vector.load %arg12[%c0_12, %c0_13] : memref<1x256xf32, #tpu.memory_space<vmem>>, vector<1x256xf32>
      %21 = vector.broadcast %20 : vector<1x256xf32> to vector<8x256xf32>
      %22 = arith.addf %19, %21 : vector<8x256xf32>
      %cst_14 = arith.constant 0.000000e+00 : f32
      %23 = vector.broadcast %cst_14 : f32 to vector<8x256xf32>
      %24 = arith.maximumf %22, %23 : vector<8x256xf32>
      %c0_15 = arith.constant 0 : index
      %c0_16 = arith.constant 0 : index
      %25 = vector.load %arg6[%c0_15, %c0_16] : memref<256x128xf32, #tpu.memory_space<vmem>>, vector<256x128xf32>
      %cst_17 = arith.constant dense<0.000000e+00> : vector<8x128xf32>
      %26 = tpu.matmul %24, %25, %cst_17 {dimension_numbers = #tpu.dot_dimension_numbers<[1], [0], [0], [1], [0, 0, 1, 1], [], []>} : vector<8x256xf32>, vector<256x128xf32>, vector<8x128xf32> -> vector<8x128xf32>
      %c0_18 = arith.constant 0 : index
      %c0_19 = arith.constant 0 : index
      %27 = vector.load %arg7[%c0_18, %c0_19] : memref<1x128xf32, #tpu.memory_space<vmem>>, vector<1x128xf32>
      %28 = vector.broadcast %27 : vector<1x128xf32> to vector<8x128xf32>
      %29 = arith.addf %26, %28 : vector<8x128xf32>
      %c0_20 = arith.constant 0 : index
      %c0_21 = arith.constant 0 : index
      %30 = vector.load %arg8[%c0_20, %c0_21] : memref<8x128xf32, #tpu.memory_space<vmem>>, vector<8x128xf32>
      tpu.vector_store %arg8[%c0_20, %c0_21], %29 {strides = array<i32>} : memref<8x128xf32, #tpu.memory_space<vmem>>, vector<8x128xf32>,
    } else {
    }
    return
  }
  func.func @transform_0(%arg0: i32, %arg1: i32) -> (i32, i32) {
    %c0_i32 = arith.constant 0 : i32
    %c0_i32_0 = arith.constant 0 : i32
    return %arg1, %c0_i32 : i32, i32
  }
  func.func @transform_1(%arg0: i32, %arg1: i32) -> (i32, i32) {
    %c0_i32 = arith.constant 0 : i32
    %c0_i32_0 = arith.constant 0 : i32
    %c0_i32_1 = arith.constant 0 : i32
    return %c0_i32, %c0_i32_0 : i32, i32
  }
  func.func @transform_2(%arg0: i32, %arg1: i32) -> (i32, i32) {
    %c0_i32 = arith.constant 0 : i32
    %c0_i32_0 = arith.constant 0 : i32
    %c0_i32_1 = arith.constant 0 : i32
    return %c0_i32, %c0_i32_0 : i32, i32
  }
  func.func @transform_3(%arg0: i32, %arg1: i32) -> (i32, i32) {
    %c0_i32 = arith.constant 0 : i32
    %c0_i32_0 = arith.constant 0 : i32
    %c0_i32_1 = arith.constant 0 : i32
    return %c0_i32, %c0_i32_0 : i32, i32
  }
  func.func @transform_4(%arg0: i32, %arg1: i32) -> (i32, i32) {
    %c0_i32 = arith.constant 0 : i32
    %c0_i32_0 = arith.constant 0 : i32
    %c0_i32_1 = arith.constant 0 : i32
    return %c0_i32, %c0_i32_0 : i32, i32
  }
  func.func @transform_5(%arg0: i32, %arg1: i32) -> (i32, i32) {
    %c0_i32 = arith.constant 0 : i32
    %c0_i32_0 = arith.constant 0 : i32
    %c0_i32_1 = arith.constant 0 : i32
    return %c0_i32, %c0_i32_0 : i32, i32
  }
  func.func @transform_6(%arg0: i32, %arg1: i32) -> (i32, i32) {
    %0 = arith.muli %arg1, %arg0 : i32
    %c0_i32 = arith.constant 0 : i32
    %c0_i32_0 = arith.constant 0 : i32
    return %0, %c0_i32 : i32, i32
  }
}

</mosaic_0001>

<llo_original>
// kernel: tpu_custom_call.1
$region0: #{tpu_custom_call.1}
  #allocation0 [shape = 'u32[]', space=smem, size = 0x4, offset = 0x4, fixed_abs, tag = 'smem constant byte address 0x4 - core index']
  #allocation1 [shape = 'u32[144,128]{1,0:T(1,128)}', space=vmem, size = 0x12000, scoped, tag = 'internal scratch']
  #allocation2 [shape = 'f32[1,256]{1,0:T(1,128)}', space=vmem, size = 0x400, scoped, tag = 'scratch operand']
  #allocation3 [shape = 'f32[1,256]{1,0:T(1,128)}', space=vmem, size = 0x400, scoped, tag = 'scratch operand']
  #allocation4 [shape = 'f32[1,256]{1,0:T(1,128)}', space=vmem, size = 0x400, scoped, tag = 'scratch operand']
  #allocation5 [shape = 'f32[1,256]{1,0:T(1,128)}', space=vmem, size = 0x400, scoped, tag = 'scratch operand']
  %s0 = inlined_call_operand.hbm [shape: f32[24,32], index: 0, kind: input, shape index: {}]
  %s1 = inlined_call_operand.hbm [shape: f32[32,256], index: 1, kind: input, shape index: {}]
  %s2 = inlined_call_operand.vmem [shape: f32[1,256], index: 2, kind: input, shape index: {}]
  %s3 = inlined_call_operand.vmem [shape: f32[1,256], index: 3, kind: input, shape index: {}]
  %s4 = inlined_call_operand.hbm [shape: f32[256,128], index: 4, kind: input, shape index: {}]
  %s5 = inlined_call_operand.vmem [shape: f32[1,128], index: 5, kind: input, shape index: {}]
  %s6 = inlined_call_operand.hbm [shape: f32[24,128], index: 6, kind: output, shape index: {}]
  %s7 = sld [smem:[#allocation0]]
  $region85: #{tpu_custom_call.1} parent=0
    _
  %s9 = ssub.s32 1, %s7
  %s10 = scalar_select 0, %s9, %s7
  $region1: #{tpu_custom_call.1} parent=0
    #allocation6 [shape = 'u8[8192]{0}', space=vmem, size = 0x2000, scoped, tag = 'input window, operand 0']
    #allocation7 [shape = 's32[2]{0}', space=sflag, size = 0x8, scoped, tag = 'scoped memory for tpu_custom_call.1']
    #allocation8 [shape = 's32[2]{0}', space=sflag, size = 0x8, scoped, tag = 'scoped memory for tpu_custom_call.1']
    #allocation9 [shape = 'u8[32768]{0}', space=vmem, size = 0x8000, scoped, tag = 'input window, operand 1, single buffered']
    #allocation10 [shape = 's32[1]{0}', space=sflag, size = 0x4, scoped, tag = 'scoped memory for tpu_custom_call.1']
    #allocation11 [shape = 'u8[131072]{0}', space=vmem, size = 0x20000, scoped, tag = 'input window, operand 4, single buffered']
    #allocation12 [shape = 'u8[8192]{0}', space=vmem, size = 0x2000, scoped, tag = 'output window, operand 0']
    %11 = vsyncpa [#allocation7], 0
    %s12 = scalar_lea.sflag [#allocation7], 1
    %13 = vsyncpa %s12, 0
    %14 = vsyncpa [#allocation10], 0
    %15 = vsyncpa [#allocation8], 0
    %s16 = scalar_lea.sflag [#allocation8], 1
    %17 = vsyncpa %s16, 0
    loop: start=0, step=1, limit=8
    $region2: #{tpu_custom_call.1} parent=1 // loop_pre_header
      _
    $region3: #{tpu_custom_call.1} parent=1 // loop_header
      %s19 = sphi 0, %s23
      %p20 = scmp.ge.s32.totalorder %s19, 8
      %s26 = sphi 0, %s38
      %s27 = sphi 0, %s34
      %s28 = sphi 0, %s26
      %s29 = sphi 0, %s27
      %s30 = sphi 0, %s28
      %s31 = sphi 0, %s29
      %s41 = sphi 0, %s43
      %s44 = sphi 0, %s41
      %s45 = sphi 0, %s44
      %s61 = sphi 0, %s45
      %s65 = sphi 0, %s65
      %s67 = sphi 0, %s65
      %s68 = sphi 0, %s67
      %s82 = sphi 0, %s68
      %s86 = sphi 0, %s86
      %s88 = sphi 0, %s86
      %s89 = sphi 0, %s88
      %s103 = sphi 0, %s89
      %s107 = sphi 0, %s107
      %s109 = sphi 0, %s107
      %s110 = sphi 0, %s109
      %s124 = sphi 0, %s110
      %s128 = sphi 0, %s128
      %s130 = sphi 0, %s128
      %s131 = sphi 0, %s130
      %s145 = sphi 0, %s131
      %s149 = sphi 0, %s149
      %s151 = sphi 0, %s149
      %s152 = sphi 0, %s151
      %s166 = sphi 0, %s152
      %s174 = sphi 0, %s176
      %s177 = sphi 0, %s174
      %s178 = sphi 0, %s177
      %s194 = sphi 0, %s178
    $region4: #{tpu_custom_call.1} parent=1 // loop_header_branch
      %22 = sbr.rel (%p20) target = $region8
    $region5: #{tpu_custom_call.1} parent=1 // loop_body
      %s24 = ssub.s32 %s19, 1
      %s25 = ssub.s32 %s19, 2
      %s32 = sadd.s32 1, %s27
      %p33 = scmp.ge.s32.totalorder %s32, 3
      %s34 = scalar_select %p33, 0, %s32
      %s35 = sadd.s32 1, %s26
      %s36 = scalar_select %p33, %s35, %s26
      %p37 = scmp.ge.s32.totalorder %s36, 2
      %s38 = scalar_select %p37, 0, %s36
      %s39 = ssub.s32 %s27, %s34
      %p40 = scmp.eq.s32.totalorder %s39, 0
      %s42 = sadd.s32 %s41, 1
      %s43 = scalar_select %p40, %s41, %s42
      %p46 = pneg %p40
      %p47 = scmp.eq.s32.totalorder %s19, 5
      %p48 = por %p46, %p47
      %p49 = scmp.ne.s32.totalorder %s41, %s44
      %p50 = scmp.eq.s32.totalorder %s19, 0
      %p51 = por %p49, %p50
      %p52 = scmp.ne.s32.totalorder %s41, %s44
      %p53 = scmp.eq.s32.totalorder %s24, 5
      %p54 = por %p52, %p53
      %p55 = scmp.ne.s32.totalorder %s44, %s45
      %p56 = scmp.eq.s32.totalorder %s24, 0
      %p57 = por %p55, %p56
      %p58 = scmp.ne.s32.totalorder %s44, %s45
      %p59 = scmp.eq.s32.totalorder %s25, 5
      %p60 = por %p58, %p59
      %p62 = scmp.ne.s32.totalorder %s45, %s61
      %p63 = scmp.eq.s32.totalorder %s25, 0
      %p64 = por %p62, %p63
      %s66 = sadd.s32 %s65, 1
      %p69 = scmp.eq.s32.totalorder %s19, 5
      %p70 = scmp.ne.s32.totalorder %s65, %s67
      %p71 = scmp.eq.s32.totalorder %s19, 0
      %p72 = por %p70, %p71
      %p73 = scmp.ne.s32.totalorder %s65, %s67
      %p74 = scmp.eq.s32.totalorder %s24, 5
      %p75 = por %p73, %p74
      %p76 = scmp.ne.s32.totalorder %s67, %s68
      %p77 = scmp.eq.s32.totalorder %s24, 0
      %p78 = por %p76, %p77
      %p79 = scmp.ne.s32.totalorder %s67, %s68
      %p80 = scmp.eq.s32.totalorder %s25, 5
      %p81 = por %p79, %p80
      %p83 = scmp.ne.s32.totalorder %s68, %s82
      %p84 = scmp.eq.s32.totalorder %s25, 0
      %p85 = por %p83, %p84
      %s87 = sadd.s32 %s86, 1
      %p90 = scmp.eq.s32.totalorder %s19, 5
      %p91 = scmp.ne.s32.totalorder %s86, %s88
      %p92 = scmp.eq.s32.totalorder %s19, 0
      %p93 = por %p91, %p92
      %p94 = scmp.ne.s32.totalorder %s86, %s88
      %p95 = scmp.eq.s32.totalorder %s24, 5
      %p96 = por %p94, %p95
      %p97 = scmp.ne.s32.totalorder %s88, %s89
      %p98 = scmp.eq.s32.totalorder %s24, 0
      %p99 = por %p97, %p98
      %p100 = scmp.ne.s32.totalorder %s88, %s89
      %p101 = scmp.eq.s32.totalorder %s25, 5
      %p102 = por %p100, %p101
      %p104 = scmp.ne.s32.totalorder %s89, %s103
      %p105 = scmp.eq.s32.totalorder %s25, 0
      %p106 = por %p104, %p105
      %s108 = sadd.s32 %s107, 1
      %p111 = scmp.eq.s32.totalorder %s19, 5
      %p112 = scmp.ne.s32.totalorder %s107, %s109
      %p113 = scmp.eq.s32.totalorder %s19, 0
      %p114 = por %p112, %p113
      %p115 = scmp.ne.s32.totalorder %s107, %s109
      %p116 = scmp.eq.s32.totalorder %s24, 5
      %p117 = por %p115, %p116
      %p118 = scmp.ne.s32.totalorder %s109, %s110
      %p119 = scmp.eq.s32.totalorder %s24, 0
      %p120 = por %p118, %p119
      %p121 = scmp.ne.s32.totalorder %s109, %s110
      %p122 = scmp.eq.s32.totalorder %s25, 5
      %p123 = por %p121, %p122
      %p125 = scmp.ne.s32.totalorder %s110, %s124
      %p126 = scmp.eq.s32.totalorder %s25, 0
      %p127 = por %p125, %p126
      %s129 = sadd.s32 %s128, 1
      %p132 = scmp.eq.s32.totalorder %s19, 5
      %p133 = scmp.ne.s32.totalorder %s128, %s130
      %p134 = scmp.eq.s32.totalorder %s19, 0
      %p135 = por %p133, %p134
      %p136 = scmp.ne.s32.totalorder %s128, %s130
      %p137 = scmp.eq.s32.totalorder %s24, 5
      %p138 = por %p136, %p137
      %p139 = scmp.ne.s32.totalorder %s130, %s131
      %p140 = scmp.eq.s32.totalorder %s24, 0
      %p141 = por %p139, %p140
      %p142 = scmp.ne.s32.totalorder %s130, %s131
      %p143 = scmp.eq.s32.totalorder %s25, 5
      %p144 = por %p142, %p143
      %p146 = scmp.ne.s32.totalorder %s131, %s145
      %p147 = scmp.eq.s32.totalorder %s25, 0
      %p148 = por %p146, %p147
      %s150 = sadd.s32 %s149, 1
      %p153 = scmp.eq.s32.totalorder %s19, 5
      %p154 = scmp.ne.s32.totalorder %s149, %s151
      %p155 = scmp.eq.s32.totalorder %s19, 0
      %p156 = por %p154, %p155
      %p157 = scmp.ne.s32.totalorder %s149, %s151
      %p158 = scmp.eq.s32.totalorder %s24, 5
      %p159 = por %p157, %p158
      %p160 = scmp.ne.s32.totalorder %s151, %s152
      %p161 = scmp.eq.s32.totalorder %s24, 0
      %p162 = por %p160, %p161
      %p163 = scmp.ne.s32.totalorder %s151, %s152
      %p164 = scmp.eq.s32.totalorder %s25, 5
      %p165 = por %p163, %p164
      %p167 = scmp.ne.s32.totalorder %s152, %s166
      %p168 = scmp.eq.s32.totalorder %s25, 0
      %p169 = por %p167, %p168
      %s170 = smul.u32 %s27, %s26
      %s171 = smul.u32 %s34, %s38
      %s172 = ssub.s32 %s170, %s171
      %p173 = scmp.eq.s32.totalorder %s172, 0
      %s175 = sadd.s32 %s174, 1
      %s176 = scalar_select %p173, %s174, %s175
      %p179 = pneg %p173
      %p180 = scmp.eq.s32.totalorder %s19, 5
      %p181 = por %p179, %p180
      %p182 = scmp.ne.s32.totalorder %s174, %s177
      %p183 = scmp.eq.s32.totalorder %s19, 0
      %p184 = por %p182, %p183
      %p185 = scmp.ne.s32.totalorder %s174, %s177
      %p186 = scmp.eq.s32.totalorder %s24, 5
      %p187 = por %p185, %p186
      %p188 = scmp.ne.s32.totalorder %s177, %s178
      %p189 = scmp.eq.s32.totalorder %s24, 0
      %p190 = por %p188, %p189
      %p191 = scmp.ne.s32.totalorder %s177, %s178
      %p192 = scmp.eq.s32.totalorder %s25, 5
      %p193 = por %p191, %p192
      %p195 = scmp.ne.s32.totalorder %s178, %s194
      %p196 = scmp.eq.s32.totalorder %s25, 0
      %p197 = por %p195, %p196
      %p198 = scmp.le.s32.totalorder 1, %s19
      %p199 = scmp.lt.s32.totalorder %s19, 7
      %p200 = pnand %p198, %p199
      %p201 = pneg %p200
      // Predicated region
      $region9: #{tpu_custom_call.1} parent=5 // pred_check
        _
      $region10: #{tpu_custom_call.1} parent=5 // pred_check_branch
        %203 = sbr.rel (%p200) target = $region12
      $region11: #{tpu_custom_call.1} parent=5 // pred_region
        %s204 = ssub.s32 %s19, 1
        // Predicated region
        $region13: #{tpu_custom_call.1} parent=11 // pred_check
          %p205 = pneg %p78
        $region14: #{tpu_custom_call.1} parent=11 // pred_check_branch
          %207 = sbr.rel (%p205) target = $region16
        $region15: #{tpu_custom_call.1} parent=11 // pred_region
          %s209 = ssub.s32 1024, 1024
          %210 = vsyncadd [#allocation10], %s209
          %s211 = sshll.u32 [#allocation9], 4
          %s212 = int_to_ptr.vmem [resolvable:$true] %s211
          %217 = dma.hbm_to_vmem [thread:$0]  %s1, 1024, %s212, [#allocation10], 256, 256, 16
        $region16: #{tpu_custom_call.1} parent=11 // pred_fallthru
          _
        // Predicated region
        $region17: #{tpu_custom_call.1} parent=11 // pred_check
          %p218 = pneg %p99
        $region18: #{tpu_custom_call.1} parent=11 // pred_check_branch
          %220 = sbr.rel (%p218) target = $region20
        $region19: #{tpu_custom_call.1} parent=11 // pred_region
          _
        $region20: #{tpu_custom_call.1} parent=11 // pred_fallthru
          _
        // Predicated region
        $region21: #{tpu_custom_call.1} parent=11 // pred_check
          %p221 = pneg %p120
        $region22: #{tpu_custom_call.1} parent=11 // pred_check_branch
          %223 = sbr.rel (%p221) target = $region24
        $region23: #{tpu_custom_call.1} parent=11 // pred_region
          _
        $region24: #{tpu_custom_call.1} parent=11 // pred_fallthru
          _
        // Predicated region
        $region25: #{tpu_custom_call.1} parent=11 // pred_check
          %p224 = pneg %p141
        $region26: #{tpu_custom_call.1} parent=11 // pred_check_branch
          %226 = sbr.rel (%p224) target = $region28
        $region27: #{tpu_custom_call.1} parent=11 // pred_region
          %s228 = ssub.s32 4096, 4096
          %229 = vsyncadd [#allocation10], %s228
          %s230 = sshll.u32 [#allocation11], 4
          %s231 = int_to_ptr.vmem [resolvable:$true] %s230
          %236 = dma.hbm_to_vmem [thread:$0]  %s4, 4096, %s231, [#allocation10], 128, 128, 8
        $region28: #{tpu_custom_call.1} parent=11 // pred_fallthru
          _
        // Predicated region
        $region29: #{tpu_custom_call.1} parent=11 // pred_check
          %p237 = pneg %p162
        $region30: #{tpu_custom_call.1} parent=11 // pred_check_branch
          %239 = sbr.rel (%p237) target = $region32
        $region31: #{tpu_custom_call.1} parent=11 // pred_region
          _
        $region32: #{tpu_custom_call.1} parent=11 // pred_fallthru
          _
      $region12: #{tpu_custom_call.1} parent=5 // pred_fallthru
        _
      %p240 = scmp.lt.s32.totalorder %s19, 6
      // Predicated region
      $region33: #{tpu_custom_call.1} parent=5 // pred_check
        %p241 = pneg %p240
      $region34: #{tpu_custom_call.1} parent=5 // pred_check_branch
        %243 = sbr.rel (%p241) target = $region36
      $region35: #{tpu_custom_call.1} parent=5 // pred_region
        // Predicated region
        $region37: #{tpu_custom_call.1} parent=35 // pred_check
          %p244 = pneg %p51
        $region38: #{tpu_custom_call.1} parent=35 // pred_check_branch
          %246 = sbr.rel (%p244) target = $region40
        $region39: #{tpu_custom_call.1} parent=35 // pred_region
          %s247 = sand.u32 %s41, 1
          %s248 = scalar_lea.sflag [#allocation7], %s247
          %s249 = sand.u32 %s41, 1
          %s250 = smul.addr %s249, 8
          %s251 = scalar_lea.vmem [#allocation6], %s250
          %s253 = ssub.s32 128, 128
          %254 = vsyncadd %s248, %s253
          %s255 = smul.addr %s27, 128
          %s256 = scalar_lea.hbm %s0, %s255
          %s258 = sshll.u32 %s251, 4
          %s259 = int_to_ptr.vmem [resolvable:$true] %s258
          %261 = dma.hbm_to_vmem [thread:$0]  %s256, 128, %s259, %s248
        $region40: #{tpu_custom_call.1} parent=35 // pred_fallthru
          _
      $region36: #{tpu_custom_call.1} parent=5 // pred_fallthru
        _
      %p262 = scmp.le.s32.totalorder 1, %s19
      %p263 = scmp.lt.s32.totalorder %s19, 7
      %p264 = pnand %p262, %p263
      %p265 = pneg %p264
      // Predicated region
      $region41: #{tpu_custom_call.1} parent=5 // pred_check
        _
      $region42: #{tpu_custom_call.1} parent=5 // pred_check_branch
        %267 = sbr.rel (%p264) target = $region44
      $region43: #{tpu_custom_call.1} parent=5 // pred_region
        %s268 = ssub.s32 %s19, 1
        %s269 = sand.u32 %s44, 1
        %s270 = scalar_lea.sflag [#allocation7], %s269
        %s271 = sand.u32 %s44, 1
        %s272 = smul.addr %s271, 8
        %s273 = scalar_lea.vmem [#allocation6], %s272
        // Predicated region
        $region45: #{tpu_custom_call.1} parent=43 // pred_check
          %p274 = pneg %p57
        $region46: #{tpu_custom_call.1} parent=43 // pred_check_branch
          %276 = sbr.rel (%p274) target = $region48
        $region47: #{tpu_custom_call.1} parent=43 // pred_region
          %277 = dma.done %s270, 128
        $region48: #{tpu_custom_call.1} parent=43 // pred_fallthru
          _
        // Predicated region
        $region49: #{tpu_custom_call.1} parent=43 // pred_check
          %p278 = pneg %p78
        $region50: #{tpu_custom_call.1} parent=43 // pred_check_branch
          %280 = sbr.rel (%p278) target = $region52
        $region51: #{tpu_custom_call.1} parent=43 // pred_region
          %281 = dma.done [#allocation10], 1024
        $region52: #{tpu_custom_call.1} parent=43 // pred_fallthru
          _
        // Predicated region
        $region53: #{tpu_custom_call.1} parent=43 // pred_check
          %p282 = pneg %p141
        $region54: #{tpu_custom_call.1} parent=43 // pred_check_branch
          %284 = sbr.rel (%p282) target = $region56
        $region55: #{tpu_custom_call.1} parent=43 // pred_region
          %285 = dma.done [#allocation10], 4096
        $region56: #{tpu_custom_call.1} parent=43 // pred_fallthru
          _
        %s286 = sand.u32 %s44, 1
        %s287 = scalar_lea.sflag [#allocation7], %s286
        %s288 = sand.u32 %s44, 1
        %s289 = smul.addr %s288, 8
        %s290 = scalar_lea.vmem [#allocation6], %s289
        %p291 = pneg %p57
        %p292 = pneg %p54
        %p293 = pneg %p78
        %p294 = pneg %p75
        %p295 = pneg %p99
        %p296 = pneg %p96
        %p297 = pneg %p120
        %p298 = pneg %p117
        %p299 = pneg %p141
        %p300 = pneg %p138
        %p301 = pneg %p162
        %p302 = pneg %p159
        %p303 = pneg %p190
        %p304 = pneg %p187
        %s305 = sand.u32 %s177, 1
        %s306 = scalar_lea.sflag [#allocation8], %s305
        %s307 = sand.u32 %s177, 1
        %s308 = smul.addr %s307, 8
        %s309 = scalar_lea.vmem [#allocation12], %s308
        %s310 = smul.u32 %s29, %s28
        %p311 = scmp.eq.s32.totalorder %s28, 0
        %p312 = scmp.eq.s32.totalorder %s29, 0
        %p313 = pnand %p311, %p312
        %p314 = pneg %p313
        // Predicated region
        $region57: #{tpu_custom_call.1} parent=43 // pred_check
          _
        $region58: #{tpu_custom_call.1} parent=43 // pred_check_branch
          %316 = sbr.rel (%p313) target = $region60
        $region59: #{tpu_custom_call.1} parent=43 // pred_region
          %v317 = vlaneseq
          %vm318 = vcmp.ge.s32.totalorder %v317, 0
          %vm319 = vcmp.lt.s32.totalorder %v317, 256
          %vm320 = vmand %vm318, %vm319
          %321 = vst.msk [vmem:[#allocation2] sm:$0x3] %vm320, 0.0
          %322 = vst.msk [vmem:[#allocation3] sm:$0x3] %vm320, 0.0
        $region60: #{tpu_custom_call.1} parent=43 // pred_fallthru
          _
        // Predicated region
        $region61: #{tpu_custom_call.1} parent=43 // pred_check
          %p323 = pneg %p311
        $region62: #{tpu_custom_call.1} parent=43 // pred_check_branch
          %325 = sbr.rel (%p323) target = $region64
        $region63: #{tpu_custom_call.1} parent=43 // pred_region
          %v326 = vld [vmem:[%s273] sm:$0xff]
          %v327 = vld [vmem:[#allocation9] sm:$0xff]
          %v328 = vld [vmem:[#allocation9 + $0x8] sm:$0xff]
          %v329 = vld [vmem:[#allocation9 + $0x10] sm:$0xff]
          %v330 = vld [vmem:[#allocation9 + $0x18] sm:$0xff]
          %v331 = vld [vmem:[#allocation9 + $0x20] sm:$0xff]
          %v332 = vld [vmem:[#allocation9 + $0x28] sm:$0xff]
          %v333 = vld [vmem:[#allocation9 + $0x30] sm:$0xff]
          %v334 = vld [vmem:[#allocation9 + $0x38] sm:$0xff]
          %vm335 = vcmask 261120
          %v337 = vsel %vm335, %v326, 0
          %339 = vmatprep.subr.mxu0 %v328
          %340 = vmatpush1.msra.mxu0 %v327
          %341 = vmatprep.subr.mxu0 %v330
          %342 = vmatpush1.msra.mxu0 %v329
          %343 = vmatprep.subr.mxu0 %v332
          %344 = vmatpush1.msra.mxu0 %v331
          %345 = vmatprep.subr.mxu0 %v334
          %346 = vmatpush1.msra.mxu0 %v333
          %347 = vmatprep.subr.mxu0 0.0
          %348 = vmatpush1.msra.mxu0 0.0
          %349 = vmatprep.subr.mxu0 0.0
          %350 = vmatpush1.msra.mxu0 0.0
          %351 = vmatprep.subr.mxu0 0.0
          %352 = vmatpush1.msra.mxu0 0.0
          %353 = vmatprep.subr.mxu0 0.0
          %354 = vmatpush1.msra.mxu0 0.0
          %355 = vmatprep.subr.mxu0 0.0
          %356 = vmatpush1.msra.mxu0 0.0
          %357 = vmatprep.subr.mxu0 0.0
          %358 = vmatpush1.msra.mxu0 0.0
          %359 = vmatprep.subr.mxu0 0.0
          %360 = vmatpush1.msra.mxu0 0.0
          %361 = vmatprep.subr.mxu0 0.0
          %362 = vmatpush1.msra.mxu0 0.0
          %363 = vmatprep.subr.mxu0 0.0
          %364 = vmatpush1.msra.mxu0 0.0
          %365 = vmatprep.subr.mxu0 0.0
          %366 = vmatpush1.msra.mxu0 0.0
          %367 = vmatprep.subr.mxu0 0.0
          %368 = vmatpush1.msra.mxu0 0.0
          %369 = vmatprep.subr.mxu0 0.0
          %370 = vmatpush1.msra.mxu0 0.0
          %371 = vmatprep.subr.mxu0 0.0
          %372 = vmatpush1.msra.mxu0 0.0
          %373 = vmatprep.subr.mxu0 0.0
          %374 = vmatpush1.msra.mxu0 0.0
          %375 = vmatprep.subr.mxu0 0.0
          %376 = vmatpush1.msra.mxu0 0.0
          %377 = vmatprep.subr.mxu0 0.0
          %378 = vmatpush1.msra.mxu0 0.0
          %379 = vmatprep.subr.mxu0 0.0
          %380 = vmatpush1.msra.mxu0 0.0
          %381 = vmatprep.subr.mxu0 0.0
          %382 = vmatpush1.msra.mxu0 0.0
          %383 = vmatprep.subr.mxu0 0.0
          %384 = vmatpush1.msra.mxu0 0.0
          %385 = vmatprep.subr.mxu0 0.0
          %386 = vmatpush1.msra.mxu0 0.0
          %387 = vmatprep.subr.mxu0 0.0
          %388 = vmatpush1.msra.mxu0 0.0
          %389 = vmatprep.subr.mxu0 0.0
          %390 = vmatpush1.msra.mxu0 0.0
          %391 = vmatprep.subr.mxu0 0.0
          %392 = vmatpush1.msra.mxu0 0.0
          %393 = vmatprep.subr.mxu0 0.0
          %394 = vmatpush1.msra.mxu0 0.0
          %395 = vmatprep.subr.mxu0 0.0
          %396 = vmatpush1.msra.mxu0 0.0
          %397 = vmatprep.subr.mxu0 0.0
          %398 = vmatpush1.msra.mxu0 0.0
          %399 = vmatprep.subr.mxu0 0.0
          %400 = vmatpush1.msra.mxu0 0.0
          %401 = vmatprep.subr.mxu0 0.0
          %402 = vmatpush1.msra.mxu0 0.0
          %403 = vmatprep.mubr.f32.mxu0 0.0
          %404 = vmatmul.mubr.f32.gmra.mrb[0].mxu0 %v337
          %v405 = vpop.f32.mrb[0].mxu0
          %v406 = vadd.f32 0.0, %v405
          %v407 = vpop.f32.mrb[0].mxu0
          %v408 = vadd.f32 0.0, %v407
          %409 = vdwg.mxu0
          %v410 = vld [vmem:[#allocation2] sm:$0x3]
          %v411 = vrot.slane %v406, 4
          %v412 = vadd.f32 %v406, %v411
          %v413 = vrot.slane %v412, 2
          %v414 = vadd.f32 %v412, %v413
          %v415 = vrot.slane %v414, 1
          %v416 = vadd.f32 %v414, %v415
          %v417 = vrot.slane %v408, 4
          %v418 = vadd.f32 %v408, %v417
          %v419 = vrot.slane %v418, 2
          %v420 = vadd.f32 %v418, %v419
          %v421 = vrot.slane %v420, 1
          %v422 = vadd.f32 %v420, %v421
          %v425 = vcombine.low %v416, %v422
          %v427 = vunpack.c.l.s4 1966171168
          %v428 = vunpack.c.0.s8 %v427
          %v429 = vlaneseq
          %v430 = vshrl.u32 %v429, 7
          %v431 = vsub.s32 %v428, %v430
          %v432 = vrot.slane %v425, %v431
          %v434 = vunpack.c.l.s4 1966171168
          %v435 = vunpack.c.0.s8 %v434
          %v436 = vlaneseq
          %v437 = vshrl.u32 %v436, 7
          %v438 = vsub.s32 %v435, %v437
          %v439 = vrot.slane %v432, %v438
          %v441 = vadd.f32 %v410, %v439
          %v442 = vlaneseq
          %vm443 = vcmp.ge.s32.totalorder %v442, 0
          %vm444 = vcmp.lt.s32.totalorder %v442, 256
          %vm445 = vmand %vm443, %vm444
          %446 = vst.msk [vmem:[#allocation2] sm:$0x3] %vm445, %v441
          %v447 = vld [vmem:[#allocation3] sm:$0x3]
          %v448 = vmul.f32 %v406, %v406
          %v449 = vmul.f32 %v408, %v408
          %v450 = vrot.slane %v448, 4
          %v451 = vadd.f32 %v448, %v450
          %v452 = vrot.slane %v451, 2
          %v453 = vadd.f32 %v451, %v452
          %v454 = vrot.slane %v453, 1
          %v455 = vadd.f32 %v453, %v454
          %v456 = vrot.slane %v449, 4
          %v457 = vadd.f32 %v449, %v456
          %v458 = vrot.slane %v457, 2
          %v459 = vadd.f32 %v457, %v458
          %v460 = vrot.slane %v459, 1
          %v461 = vadd.f32 %v459, %v460
          %v464 = vcombine.low %v455, %v461
          %v466 = vunpack.c.l.s4 1966171168
          %v467 = vunpack.c.0.s8 %v466
          %v468 = vlaneseq
          %v469 = vshrl.u32 %v468, 7
          %v470 = vsub.s32 %v467, %v469
          %v471 = vrot.slane %v464, %v470
          %v473 = vunpack.c.l.s4 1966171168
          %v474 = vunpack.c.0.s8 %v473
          %v475 = vlaneseq
          %v476 = vshrl.u32 %v475, 7
          %v477 = vsub.s32 %v474, %v476
          %v478 = vrot.slane %v471, %v477
          %v480 = vadd.f32 %v447, %v478
          %481 = vst.msk [vmem:[#allocation3] sm:$0x3] %vm445, %v480
        $region64: #{tpu_custom_call.1} parent=43 // pred_fallthru
          _
        %p482 = scmp.eq.s32.totalorder %s28, 1
        // Predicated region
        $region65: #{tpu_custom_call.1} parent=43 // pred_check
          %p483 = pneg %p482
        $region66: #{tpu_custom_call.1} parent=43 // pred_check_branch
          %485 = sbr.rel (%p483) target = $region68
        $region67: #{tpu_custom_call.1} parent=43 // pred_region
          // Predicated region
          $region69: #{tpu_custom_call.1} parent=67 // pred_check
            %p486 = pneg %p312
          $region70: #{tpu_custom_call.1} parent=67 // pred_check_branch
            %488 = sbr.rel (%p486) target = $region72
          $region71: #{tpu_custom_call.1} parent=67 // pred_region
            %v489 = vld [vmem:[#allocation2] sm:$0x3]
            %v490 = vmul.f32 %v489, 0.041666668
            %v491 = vld [vmem:[#allocation3] sm:$0x3]
            %v492 = vmul.f32 %v491, 0.041666668
            %v493 = vmul.f32 %v490, %v490
            %v494 = vsub.f32 %v492, %v493
            %v495 = vmax.f32 %v494, 0.0
            %v496 = vld [vmem:[%s2] sm:$0x3]
            %v497 = vadd.f32 %v495, 1e-05
            %v498 = vrsqrt.pop %v497
            %v499 = vmul.f32 %v496, %v498
            %v500 = vlaneseq
            %vm501 = vcmp.ge.s32.totalorder %v500, 0
            %vm502 = vcmp.lt.s32.totalorder %v500, 256
            %vm503 = vmand %vm501, %vm502
            %504 = vst.msk [vmem:[#allocation4] sm:$0x3] %vm503, %v499
            %v505 = vld [vmem:[%s3] sm:$0x3]
            %v506 = vmul.f32 %v490, %v499
            %v507 = vsub.f32 %v505, %v506
            %508 = vst.msk [vmem:[#allocation5] sm:$0x3] %vm503, %v507
          $region72: #{tpu_custom_call.1} parent=67 // pred_fallthru
            _
          %v509 = vld [vmem:[%s273] sm:$0xff]
          %v510 = vld [vmem:[#allocation9] sm:$0xff]
          %v511 = vld [vmem:[#allocation9 + $0x8] sm:$0xff]
          %v512 = vld [vmem:[#allocation9 + $0x10] sm:$0xff]
          %v513 = vld [vmem:[#allocation9 + $0x18] sm:$0xff]
          %v514 = vld [vmem:[#allocation9 + $0x20] sm:$0xff]
          %v515 = vld [vmem:[#allocation9 + $0x28] sm:$0xff]
          %v516 = vld [vmem:[#allocation9 + $0x30] sm:$0xff]
          %v517 = vld [vmem:[#allocation9 + $0x38] sm:$0xff]
          %vm518 = vcmask 261120
          %v520 = vsel %vm518, %v509, 0
          %522 = vmatprep.subr.mxu0 %v511
          %523 = vmatpush1.msra.mxu0 %v510
          %524 = vmatprep.subr.mxu0 %v513
          %525 = vmatpush1.msra.mxu0 %v512
          %526 = vmatprep.subr.mxu0 %v515
          %527 = vmatpush1.msra.mxu0 %v514
          %528 = vmatprep.subr.mxu0 %v517
          %529 = vmatpush1.msra.mxu0 %v516
          %530 = vmatprep.subr.mxu0 0.0
          %531 = vmatpush1.msra.mxu0 0.0
          %532 = vmatprep.subr.mxu0 0.0
          %533 = vmatpush1.msra.mxu0 0.0
          %534 = vmatprep.subr.mxu0 0.0
          %535 = vmatpush1.msra.mxu0 0.0
          %536 = vmatprep.subr.mxu0 0.0
          %537 = vmatpush1.msra.mxu0 0.0
          %538 = vmatprep.subr.mxu0 0.0
          %539 = vmatpush1.msra.mxu0 0.0
          %540 = vmatprep.subr.mxu0 0.0
          %541 = vmatpush1.msra.mxu0 0.0
          %542 = vmatprep.subr.mxu0 0.0
          %543 = vmatpush1.msra.mxu0 0.0
          %544 = vmatprep.subr.mxu0 0.0
          %545 = vmatpush1.msra.mxu0 0.0
          %546 = vmatprep.subr.mxu0 0.0
          %547 = vmatpush1.msra.mxu0 0.0
          %548 = vmatprep.subr.mxu0 0.0
          %549 = vmatpush1.msra.mxu0 0.0
          %550 = vmatprep.subr.mxu0 0.0
          %551 = vmatpush1.msra.mxu0 0.0
          %552 = vmatprep.subr.mxu0 0.0
          %553 = vmatpush1.msra.mxu0 0.0
          %554 = vmatprep.subr.mxu0 0.0
          %555 = vmatpush1.msra.mxu0 0.0
          %556 = vmatprep.subr.mxu0 0.0
          %557 = vmatpush1.msra.mxu0 0.0
          %558 = vmatprep.subr.mxu0 0.0
          %559 = vmatpush1.msra.mxu0 0.0
          %560 = vmatprep.subr.mxu0 0.0
          %561 = vmatpush1.msra.mxu0 0.0
          %562 = vmatprep.subr.mxu0 0.0
          %563 = vmatpush1.msra.mxu0 0.0
          %564 = vmatprep.subr.mxu0 0.0
          %565 = vmatpush1.msra.mxu0 0.0
          %566 = vmatprep.subr.mxu0 0.0
          %567 = vmatpush1.msra.mxu0 0.0
          %568 = vmatprep.subr.mxu0 0.0
          %569 = vmatpush1.msra.mxu0 0.0
          %570 = vmatprep.subr.mxu0 0.0
          %571 = vmatpush1.msra.mxu0 0.0
          %572 = vmatprep.subr.mxu0 0.0
          %573 = vmatpush1.msra.mxu0 0.0
          %574 = vmatprep.subr.mxu0 0.0
          %575 = vmatpush1.msra.mxu0 0.0
          %576 = vmatprep.subr.mxu0 0.0
          %577 = vmatpush1.msra.mxu0 0.0
          %578 = vmatprep.subr.mxu0 0.0
          %579 = vmatpush1.msra.mxu0 0.0
          %580 = vmatprep.subr.mxu0 0.0
          %581 = vmatpush1.msra.mxu0 0.0
          %582 = vmatprep.subr.mxu0 0.0
          %583 = vmatpush1.msra.mxu0 0.0
          %584 = vmatprep.subr.mxu0 0.0
          %585 = vmatpush1.msra.mxu0 0.0
          %586 = vmatprep.mubr.f32.mxu0 0.0
          %587 = vmatmul.mubr.f32.gmra.mrb[0].mxu0 %v520
          %v588 = vpop.f32.mrb[0].mxu0
          %v589 = vadd.f32 0.0, %v588
          %v590 = vpop.f32.mrb[0].mxu0
          %v591 = vadd.f32 0.0, %v590
          %592 = vdwg.mxu0
          %v593 = vld [vmem:[#allocation4] sm:$0x3]
          %v595 = vlaneseq
          %v596 = vshrl.u32 %v595, 7
          %v597 = vsub.s32 0, %v596
          %v598 = vrot.slane %v593, %v597
          %v599 = vlaneseq
          %v600 = vshrl.u32 %v599, 7
          %v601 = vsub.s32 1, %v600
          %v602 = vrot.slane %v593, %v601
          %v605 = vmul.f32 %v589, %v598
          %v606 = vmul.f32 %v591, %v602
          %v607 = vld [vmem:[#allocation5] sm:$0x3]
          %v609 = vlaneseq
          %v610 = vshrl.u32 %v609, 7
          %v611 = vsub.s32 0, %v610
          %v612 = vrot.slane %v607, %v611
          %v613 = vlaneseq
          %v614 = vshrl.u32 %v613, 7
          %v615 = vsub.s32 1, %v614
          %v616 = vrot.slane %v607, %v615
          %v619 = vadd.f32 %v605, %v612
          %v620 = vadd.f32 %v606, %v616
          %v621 = vmax.f32 %v619, 0.0
          %v622 = vmax.f32 %v620, 0.0
          %v623 = vld [vmem:[#allocation11] sm:$0xff]
          %v624 = vld [vmem:[#allocation11 + $0x8] sm:$0xff]
          %v625 = vld [vmem:[#allocation11 + $0x10] sm:$0xff]
          %v626 = vld [vmem:[#allocation11 + $0x18] sm:$0xff]
          %v627 = vld [vmem:[#allocation11 + $0x20] sm:$0xff]
          %v628 = vld [vmem:[#allocation11 + $0x28] sm:$0xff]
          %v629 = vld [vmem:[#allocation11 + $0x30] sm:$0xff]
          %v630 = vld [vmem:[#allocation11 + $0x38] sm:$0xff]
          %v631 = vld [vmem:[#allocation11 + $0x40] sm:$0xff]
          %v632 = vld [vmem:[#allocation11 + $0x48] sm:$0xff]
          %v633 = vld [vmem:[#allocation11 + $0x50] sm:$0xff]
          %v634 = vld [vmem:[#allocation11 + $0x58] sm:$0xff]
          %v635 = vld [vmem:[#allocation11 + $0x60] sm:$0xff]
          %v636 = vld [vmem:[#allocation11 + $0x68] sm:$0xff]
          %v637 = vld [vmem:[#allocation11 + $0x70] sm:$0xff]
          %v638 = vld [vmem:[#allocation11 + $0x78] sm:$0xff]
          %v639 = vld [vmem:[#allocation11 + $0x80] sm:$0xff]
          %v640 = vld [vmem:[#allocation11 + $0x88] sm:$0xff]
          %v641 = vld [vmem:[#allocation11 + $0x90] sm:$0xff]
          %v642 = vld [vmem:[#allocation11 + $0x98] sm:$0xff]
          %v643 = vld [vmem:[#allocation11 + $0xa0] sm:$0xff]
          %v644 = vld [vmem:[#allocation11 + $0xa8] sm:$0xff]
          %v645 = vld [vmem:[#allocation11 + $0xb0] sm:$0xff]
          %v646 = vld [vmem:[#allocation11 + $0xb8] sm:$0xff]
          %v647 = vld [vmem:[#allocation11 + $0xc0] sm:$0xff]
          %v648 = vld [vmem:[#allocation11 + $0xc8] sm:$0xff]
          %v649 = vld [vmem:[#allocation11 + $0xd0] sm:$0xff]
          %v650 = vld [vmem:[#allocation11 + $0xd8] sm:$0xff]
          %v651 = vld [vmem:[#allocation11 + $0xe0] sm:$0xff]
          %v652 = vld [vmem:[#allocation11 + $0xe8] sm:$0xff]
          %v653 = vld [vmem:[#allocation11 + $0xf0] sm:$0xff]
          %v654 = vld [vmem:[#allocation11 + $0xf8] sm:$0xff]
          %v655 = vld [vmem:[%s5] sm:$0x1]
          %v657 = vlaneseq
          %v658 = vshrl.u32 %v657, 7
          %v659 = vsub.s32 0, %v658
          %v660 = vrot.slane %v655, %v659
          %662 = vmatprep.subr.mxu0 0.0
          %663 = vmatpush1.msra.mxu0 %v623
          %664 = vmatprep.subr.mxu0 0.0
          %665 = vmatpush1.msra.mxu0 %v624
          %666 = vmatprep.subr.mxu0 0.0
          %667 = vmatpush1.msra.mxu0 %v625
          %668 = vmatprep.subr.mxu0 0.0
          %669 = vmatpush1.msra.mxu0 %v626
          %670 = vmatprep.subr.mxu0 0.0
          %671 = vmatpush1.msra.mxu0 %v627
          %672 = vmatprep.subr.mxu0 0.0
          %673 = vmatpush1.msra.mxu0 %v628
          %674 = vmatprep.subr.mxu0 0.0
          %675 = vmatpush1.msra.mxu0 %v629
          %676 = vmatprep.subr.mxu0 0.0
          %677 = vmatpush1.msra.mxu0 %v630
          %678 = vmatprep.subr.mxu0 0.0
          %679 = vmatpush1.msra.mxu0 %v631
          %680 = vmatprep.subr.mxu0 0.0
          %681 = vmatpush1.msra.mxu0 %v632
          %682 = vmatprep.subr.mxu0 0.0
          %683 = vmatpush1.msra.mxu0 %v633
          %684 = vmatprep.subr.mxu0 0.0
          %685 = vmatpush1.msra.mxu0 %v634
          %686 = vmatprep.subr.mxu0 0.0
          %687 = vmatpush1.msra.mxu0 %v635
          %688 = vmatprep.subr.mxu0 0.0
          %689 = vmatpush1.msra.mxu0 %v636
          %690 = vmatprep.subr.mxu0 0.0
          %691 = vmatpush1.msra.mxu0 %v637
          %692 = vmatprep.subr.mxu0 0.0
          %693 = vmatpush1.msra.mxu0 %v638
          %694 = vmatprep.subr.mxu0 0.0
          %695 = vmatpush1.msra.mxu0 %v639
          %696 = vmatprep.subr.mxu0 0.0
          %697 = vmatpush1.msra.mxu0 %v640
          %698 = vmatprep.subr.mxu0 0.0
          %699 = vmatpush1.msra.mxu0 %v641
          %700 = vmatprep.subr.mxu0 0.0
          %701 = vmatpush1.msra.mxu0 %v642
          %702 = vmatprep.subr.mxu0 0.0
          %703 = vmatpush1.msra.mxu0 %v643
          %704 = vmatprep.subr.mxu0 0.0
          %705 = vmatpush1.msra.mxu0 %v644
          %706 = vmatprep.subr.mxu0 0.0
          %707 = vmatpush1.msra.mxu0 %v645
          %708 = vmatprep.subr.mxu0 0.0
          %709 = vmatpush1.msra.mxu0 %v646
          %710 = vmatprep.subr.mxu0 0.0
          %711 = vmatpush1.msra.mxu0 %v647
          %712 = vmatprep.subr.mxu0 0.0
          %713 = vmatpush1.msra.mxu0 %v648
          %714 = vmatprep.subr.mxu0 0.0
          %715 = vmatpush1.msra.mxu0 %v649
          %716 = vmatprep.subr.mxu0 0.0
          %717 = vmatpush1.msra.mxu0 %v650
          %718 = vmatprep.subr.mxu0 0.0
          %719 = vmatpush1.msra.mxu0 %v651
          %720 = vmatprep.subr.mxu0 0.0
          %721 = vmatpush1.msra.mxu0 %v652
          %722 = vmatprep.subr.mxu0 0.0
          %723 = vmatpush1.msra.mxu0 %v653
          %724 = vmatprep.subr.mxu0 0.0
          %725 = vmatpush1.msra.mxu0 %v654
          %726 = vmatprep.mubr.f32.mxu0 %v622
          %727 = vmatmul.mubr.f32.gmra.mrb[0].mxu0 %v621
          %v728 = vpop.f32.mrb[0].mxu0
          %v729 = vadd.f32 %v660, %v728
          %v730 = vpop.f32.mrb[0].mxu0
          %731 = vdwg.mxu0
          %732 = vst [vmem:[%s309] sm:$0xff] %v729
        $region68: #{tpu_custom_call.1} parent=43 // pred_fallthru
          _
        %s733 = sand.u32 %s177, 1
        %s734 = scalar_lea.sflag [#allocation8], %s733
        %s735 = sand.u32 %s177, 1
        %s736 = smul.addr %s735, 8
        %s737 = scalar_lea.vmem [#allocation12], %s736
        // Predicated region
        $region73: #{tpu_custom_call.1} parent=43 // pred_check
          %p738 = pneg %p187
        $region74: #{tpu_custom_call.1} parent=43 // pred_check_branch
          %740 = sbr.rel (%p738) target = $region76
        $region75: #{tpu_custom_call.1} parent=43 // pred_region
          %s741 = smul.u32 %s29, %s28
          %s743 = ssub.s32 128, 128
          %744 = vsyncadd %s734, %s743
          %s745 = smul.addr %s741, 128
          %s746 = scalar_lea.hbm %s6, %s745
          %s748 = sshll.u32 %s737, 4
          %s749 = int_to_ptr.vmem [resolvable:$true] %s748
          %751 = dma.vmem_to_hbm [thread:$0]  %s749, 128, %s746, %s734
        $region76: #{tpu_custom_call.1} parent=43 // pred_fallthru
          _
      $region44: #{tpu_custom_call.1} parent=5 // pred_fallthru
        _
      %p752 = scmp.le.s32.totalorder 2, %s19
      // Predicated region
      $region77: #{tpu_custom_call.1} parent=5 // pred_check
        %p753 = pneg %p752
      $region78: #{tpu_custom_call.1} parent=5 // pred_check_branch
        %755 = sbr.rel (%p753) target = $region80
      $region79: #{tpu_custom_call.1} parent=5 // pred_region
        %s756 = ssub.s32 %s19, 2
        // Predicated region
        $region81: #{tpu_custom_call.1} parent=79 // pred_check
          %p757 = pneg %p193
        $region82: #{tpu_custom_call.1} parent=79 // pred_check_branch
          %759 = sbr.rel (%p757) target = $region84
        $region83: #{tpu_custom_call.1} parent=79 // pred_region
          %s760 = sand.u32 %s178, 1
          %s761 = scalar_lea.sflag [#allocation8], %s760
          %s762 = sand.u32 %s178, 1
          %s763 = smul.addr %s762, 8
          %s764 = scalar_lea.vmem [#allocation12], %s763
          %765 = dma.done %s761, 128
        $region84: #{tpu_custom_call.1} parent=79 // pred_fallthru
          _
      $region80: #{tpu_custom_call.1} parent=5 // pred_fallthru
        _
    $region6: #{tpu_custom_call.1} parent=1 // loop_footer
      %s23 = sadd.s32 1, %s19
    $region7: #{tpu_custom_call.1} parent=1 // loop_footer_branch
      %18 = sbr.rel target = $region3
    $region8: #{tpu_custom_call.1} parent=1 // loop_exit
      _
    %766 = vsyncpa [#allocation7], 1
    %s767 = scalar_lea.sflag [#allocation7], 1
    %768 = vsyncpa %s767, 1
    %769 = vsyncpa [#allocation10], 1
    %770 = vsyncpa [#allocation8], 1
    %s771 = scalar_lea.sflag [#allocation8], 1
    %772 = vsyncpa %s771, 1

</llo_original>
